<compile_context>
chip_gen: v5e
topology: v5e:2x2
jax: 0.10.0
libtpu: 0.0.40
codegen_flags: <defaults>
</compile_context>

<pallas_src>
import functools

import jax
import jax.numpy as jnp
import numpy as np
from jax.experimental import pallas as pl
from jax.experimental.pallas import tpu as pltpu

IGNORE_LABEL = 255
NUM_CLASSES = 19  # module hard-codes 19 classes for the online weight


def _round_up(x, m):
    return ((x + m - 1) // m) * m


def _ce2d_kernel(logits_ref, target_ref, cnt_out_ref, nll_out_ref,
                 cnt_acc, nll_acc, *, hw_total, tile_hw):
    """One (batch b, pixel-tile i) step.

    Layout: classes on sublanes, pixels on lanes.
      logits_ref: (1, C, T) float   target_ref: (1, 1, T) int32
      outputs / scratch: (1, C, 1) float32 (per-class count, per-class NLL sum)
    """
    i = pl.program_id(1)

    @pl.when(i == 0)
    def _():
        cnt_acc[...] = jnp.zeros_like(cnt_acc)
        nll_acc[...] = jnp.zeros_like(nll_acc)

    x = logits_ref[...].astype(jnp.float32)        # (1, C, T)
    tgt = target_ref[...]                          # (1, 1, T) int32
    c = x.shape[1]
    t = x.shape[2]

    # Ragged-tail mask: global pixel index within this image (hw_total static).
    lane_pos = jax.lax.broadcasted_iota(jnp.int32, (1, 1, t), 2) + i * tile_hw
    in_bounds = lane_pos < hw_total                                    # (1, 1, T)

    valid = (tgt >= 0) & (tgt != IGNORE_LABEL) & in_bounds             # (1, 1, T)
    valid_f = valid.astype(jnp.float32)

    class_ids = jax.lax.broadcasted_iota(jnp.int32, (1, c, 1), 1)      # (1, C, 1)
    onehot = (tgt == class_ids).astype(jnp.float32)                    # (1, C, T)

    # log-sum-exp over classes: sublane (axis=1) reduction.
    m = jnp.max(x, axis=1, keepdims=True)                              # (1, 1, T)
    lse = m + jnp.log(jnp.sum(jnp.exp(x - m), axis=1, keepdims=True))  # (1, 1, T)
    picked = jnp.sum(onehot * x, axis=1, keepdims=True)                # (1, 1, T)
    # Use where (not multiply) so garbage logits in an OOB tail can't make NaNs.
    nll = jnp.where(valid, lse - picked, 0.0)                          # (1, 1, T)

    oh_valid = onehot * valid_f                                        # (1, C, T)
    cnt_acc[...] += jnp.sum(oh_valid, axis=2, keepdims=True)           # (1, C, 1)
    nll_acc[...] += jnp.sum(oh_valid * nll, axis=2, keepdims=True)     # (1, C, 1)

    @pl.when(i == pl.num_programs(1) - 1)
    def _():
        cnt_out_ref[...] = cnt_acc[...]
        nll_out_ref[...] = nll_acc[...]


@functools.partial(jax.jit, static_argnames=("tile_hw",))
def cross_entropy_2d(predict, target, *, tile_hw=65536):
    """predict: (n, c, h, w) float, target: (n, h, w) int.  Returns scalar loss."""
    n, c, h, w = predict.shape
    assert target.shape == (n, h, w)
    hw = h * w

    # Free reshapes only: keep NCHW's natural (classes-on-sublane) layout.
    logits = predict.reshape(n, c, hw)
    tgt = target.reshape(n, 1, hw).astype(jnp.int32)

    # Pixel-axis tile (multiple of 128); partial tail is masked in-kernel.
    tile = max(128, (int(tile_hw) // 128) * 128)
    tile = min(tile, _round_up(hw, 128))
    num_tiles = (hw + tile - 1) // tile

    kernel = functools.partial(_ce2d_kernel, hw_total=hw, tile_hw=tile)

    # VMEM budget: double-buffered, sublane-padded logits + target blocks plus
    # margin.  Capped at 64 MiB so oversized requests still fit v7x VMEM.
    logits_blk_bytes = _round_up(c, 8) * tile * 4
    tgt_blk_bytes = 8 * tile * 4
    vmem_limit = min(
        max(32 << 20, 2 * (logits_blk_bytes + tgt_blk_bytes) + (2 << 20)),
        64 << 20)

    cnt, nllsum = pl.pallas_call(
        kernel,
        out_shape=(
            jax.ShapeDtypeStruct((n, c, 1), jnp.float32),
            jax.ShapeDtypeStruct((n, c, 1), jnp.float32),
        ),
        grid_spec=pltpu.PrefetchScalarGridSpec(
            num_scalar_prefetch=0,
            grid=(n, num_tiles),
            in_specs=[
                pl.BlockSpec((1, c, tile), lambda b, i: (b, 0, i)),
                pl.BlockSpec((1, 1, tile), lambda b, i: (b, 0, i)),
            ],
            out_specs=[
                pl.BlockSpec((1, c, 1), lambda b, i: (b, 0, 0)),
                pl.BlockSpec((1, c, 1), lambda b, i: (b, 0, 0)),
            ],
            scratch_shapes=[
                pltpu.VMEM((1, c, 1), jnp.float32),
                pltpu.VMEM((1, c, 1), jnp.float32),
            ],
        ),
        compiler_params=pltpu.CompilerParams(
            dimension_semantics=("parallel", "arbitrary"),
            vmem_limit_bytes=vmem_limit,
        ),
    )(logits, tgt)

    freq = jnp.sum(cnt[:, :, 0], axis=0)      # per-class valid-pixel count
    s = jnp.sum(nllsum[:, :, 0], axis=0)      # per-class NLL sum
    total = jnp.sum(freq)
    num = jnp.sum(freq * s)
    den = jnp.sum(freq * freq)
    # All-ignored input -> PyTorch returns zeros(1); here scalar 0.0.
    loss = jnp.where(total > 0, num / jnp.where(den > 0, den, 1.0), 0.0)
    return loss


def _reference_loss(predict, target):
    """Pure-JAX reference mirroring the PyTorch forward (for sanity check)."""
    n, c, h, w = predict.shape
    logits = jnp.transpose(predict, (0, 2, 3, 1)).reshape(-1, c)
    tgt = target.reshape(-1)
    valid = (tgt >= 0) & (tgt != IGNORE_LABEL)
    freq = jnp.array([jnp.sum(tgt == k) for k in range(c)], jnp.float32)
    weight = freq / jnp.sum(freq)
    logp = jax.nn.log_softmax(logits, axis=-1)
    tgt_safe = jnp.where(valid, tgt, 0)
    nll = -jnp.take_along_axis(logp, tgt_safe[:, None], axis=1)[:, 0]
    wpix = weight[tgt_safe] * valid.astype(jnp.float32)
    return jnp.sum(wpix * nll) / jnp.sum(wpix)


if __name__ == "__main__":
    key = jax.random.PRNGKey(0)
    k1, k2, k3 = jax.random.split(key, 3)

    N, C, H, W = 2, NUM_CLASSES, 16, 16
    predict = jax.random.normal(k1, (N, C, H, W), dtype=jnp.float32)
    target = jax.random.randint(k2, (N, H, W), 0, C, dtype=jnp.int32)
    # sprinkle some ignore_label pixels
    ignore_mask = jax.random.uniform(k3, (N, H, W)) < 0.1
    target = jnp.where(ignore_mask, IGNORE_LABEL, target)

    loss = cross_entropy_2d(predict, target)
    loss = jax.block_until_ready(loss)

    ref = _reference_loss(predict, target)
    np.testing.assert_allclose(np.asarray(loss), np.asarray(ref), rtol=1e-4, atol=1e-5)

    print("KERNEL_OK")
</pallas_src>

<mosaic_0001>
module attributes {stable_mosaic.version = 11 : i64} {
  func.func @_ce2d_kernel(%arg0: i32, %arg1: i32, %arg2: memref<1x19x256xf32, #tpu.memory_space<vmem>>, %arg3: memref<1x1x256xi32, #tpu.memory_space<vmem>>, %arg4: memref<1x19x1xf32, #tpu.memory_space<vmem>>, %arg5: memref<1x19x1xf32, #tpu.memory_space<vmem>>, %arg6: memref<1x19x1xf32, #tpu.memory_space<vmem>>, %arg7: memref<1x19x1xf32, #tpu.memory_space<vmem>>) attributes {dimension_semantics = [#tpu.dimension_semantics<parallel>, #tpu.dimension_semantics<arbitrary>], iteration_bounds = array<i64: 2, 1>, scalar_prefetch = 0 : i64, scratch_operands = 2 : i64, tpu.core_type = #tpu.core_type<tc>, window_params = [{transform_indices = @transform_0, window_bounds = array<i64: 1, 19, 256>}, {transform_indices = @transform_1, window_bounds = array<i64: 1, 1, 256>}, {transform_indices = @transform_2, window_bounds = array<i64: 1, 19, 1>}, {transform_indices = @transform_3, window_bounds = array<i64: 1, 19, 1>}]} {
    %c0_i32 = arith.constant 0 : i32
    %0 = arith.cmpi eq, %arg1, %c0_i32 : i32
    %1 = arith.extui %0 : i1 to i32
    %c0_i32_0 = arith.constant 0 : i32
    %2 = arith.cmpi ne, %1, %c0_i32_0 : i32
    scf.if %2 {
      %cst_27 = arith.constant 0.000000e+00 : f32
      %57 = vector.broadcast %cst_27 : f32 to vector<1x19x1xf32>
      %c0_28 = arith.constant 0 : index
      %c0_29 = arith.constant 0 : index
      %c0_30 = arith.constant 0 : index
      %58 = vector.load %arg6[%c0_28, %c0_29, %c0_30] : memref<1x19x1xf32, #tpu.memory_space<vmem>>, vector<1x19x1xf32>
      tpu.vector_store %arg6[%c0_28, %c0_29, %c0_30], %57 {strides = array<i32>} : memref<1x19x1xf32, #tpu.memory_space<vmem>>, vector<1x19x1xf32>,
      %cst_31 = arith.constant 0.000000e+00 : f32
      %59 = vector.broadcast %cst_31 : f32 to vector<1x19x1xf32>
      %c0_32 = arith.constant 0 : index
      %c0_33 = arith.constant 0 : index
      %c0_34 = arith.constant 0 : index
      %60 = vector.load %arg7[%c0_32, %c0_33, %c0_34] : memref<1x19x1xf32, #tpu.memory_space<vmem>>, vector<1x19x1xf32>
      tpu.vector_store %arg7[%c0_32, %c0_33, %c0_34], %59 {strides = array<i32>} : memref<1x19x1xf32, #tpu.memory_space<vmem>>, vector<1x19x1xf32>,
    } else {
    }
    %c0 = arith.constant 0 : index
    %c0_1 = arith.constant 0 : index
    %c0_2 = arith.constant 0 : index
    %3 = vector.load %arg2[%c0, %c0_1, %c0_2] : memref<1x19x256xf32, #tpu.memory_space<vmem>>, vector<1x19x256xf32>
    %c0_3 = arith.constant 0 : index
    %c0_4 = arith.constant 0 : index
    %c0_5 = arith.constant 0 : index
    %4 = vector.load %arg3[%c0_3, %c0_4, %c0_5] : memref<1x1x256xi32, #tpu.memory_space<vmem>>, vector<1x1x256xi32>
    %5 = tpu.iota {dimensions = array<i32: 2>} : vector<1x1x256xi32>
    %c256_i32 = arith.constant 256 : i32
    %6 = arith.muli %arg1, %c256_i32 : i32
    %7 = vector.broadcast %6 : i32 to vector<1x1x256xi32>
    %8 = arith.addi %5, %7 : vector<1x1x256xi32>
    %c256_i32_6 = arith.constant 256 : i32
    %9 = vector.broadcast %c256_i32_6 : i32 to vector<1x1x256xi32>
    %10 = arith.cmpi slt, %8, %9 : vector<1x1x256xi32>
    %c0_i32_7 = arith.constant 0 : i32
    %11 = vector.broadcast %c0_i32_7 : i32 to vector<1x1x256xi32>
    %12 = arith.cmpi sge, %4, %11 : vector<1x1x256xi32>
    %c255_i32 = arith.constant 255 : i32
    %13 = vector.broadcast %c255_i32 : i32 to vector<1x1x256xi32>
    %14 = arith.cmpi ne, %4, %13 : vector<1x1x256xi32>
    %15 = arith.andi %12, %14 : vector<1x1x256xi1>
    %16 = arith.andi %15, %10 : vector<1x1x256xi1>
    %17 = arith.extui %16 : vector<1x1x256xi1> to vector<1x1x256xi32>
    %18 = arith.sitofp %17 : vector<1x1x256xi32> to vector<1x1x256xf32>
    %19 = tpu.iota {dimensions = array<i32: 1>} : vector<1x19x1xi32>
    %20 = vector.broadcast %4 : vector<1x1x256xi32> to vector<1x19x256xi32>
    %21 = vector.broadcast %19 : vector<1x19x1xi32> to vector<1x19x256xi32>
    %22 = arith.cmpi eq, %20, %21 : vector<1x19x256xi32>
    %23 = arith.extui %22 : vector<1x19x256xi1> to vector<1x19x256xi32>
    %24 = arith.sitofp %23 : vector<1x19x256xi32> to vector<1x19x256xf32>
    %cst = arith.constant dense<0xFF800000> : vector<1x256xf32>
    %25 = vector.multi_reduction <maximumf>, %3, %cst [1] : vector<1x19x256xf32> to vector<1x256xf32>
    %26 = vector.shape_cast %25 : vector<1x256xf32> to vector<1x1x256xf32>
    %27 = vector.broadcast %26 : vector<1x1x256xf32> to vector<1x19x256xf32>
    %28 = arith.subf %3, %27 : vector<1x19x256xf32>
    %29 = math.exp %28 : vector<1x19x256xf32>
    %cst_8 = arith.constant dense<0.000000e+00> : vector<1x256xf32>
    %30 = vector.multi_reduction <add>, %29, %cst_8 [1] : vector<1x19x256xf32> to vector<1x256xf32>
    %31 = vector.shape_cast %30 : vector<1x256xf32> to vector<1x1x256xf32>
    %32 = math.log %31 : vector<1x1x256xf32>
    %33 = arith.addf %26, %32 : vector<1x1x256xf32>
    %34 = arith.mulf %24, %3 : vector<1x19x256xf32>
    %cst_9 = arith.constant dense<0.000000e+00> : vector<1x256xf32>
    %35 = vector.multi_reduction <add>, %34, %cst_9 [1] : vector<1x19x256xf32> to vector<1x256xf32>
    %36 = vector.shape_cast %35 : vector<1x256xf32> to vector<1x1x256xf32>
    %37 = arith.subf %33, %36 : vector<1x1x256xf32>
    %cst_10 = arith.constant 0.000000e+00 : f32
    %38 = vector.broadcast %cst_10 : f32 to vector<1x1x256xf32>
    %39 = arith.select %16, %37, %38 : vector<1x1x256xi1>, vector<1x1x256xf32>
    %40 = vector.broadcast %18 : vector<1x1x256xf32> to vector<1x19x256xf32>
    %41 = arith.mulf %24, %40 : vector<1x19x256xf32>
    %c0_11 = arith.constant 0 : index
    %c0_12 = arith.constant 0 : index
    %c0_13 = arith.constant 0 : index
    %42 = vector.load %arg6[%c0_11, %c0_12, %c0_13] : memref<1x19x1xf32, #tpu.memory_space<vmem>>, vector<1x19x1xf32>
    %cst_14 = arith.constant dense<0.000000e+00> : vector<1x19xf32>
    %43 = vector.multi_reduction <add>, %41, %cst_14 [2] : vector<1x19x256xf32> to vector<1x19xf32>
    %44 = vector.shape_cast %43 : vector<1x19xf32> to vector<1x19x1xf32>
    %45 = arith.addf %42, %44 : vector<1x19x1xf32>
    %c0_15 = arith.constant 0 : index
    %c0_16 = arith.constant 0 : index
    %c0_17 = arith.constant 0 : index
    %46 = vector.load %arg6[%c0_15, %c0_16, %c0_17] : memref<1x19x1xf32, #tpu.memory_space<vmem>>, vector<1x19x1xf32>
    tpu.vector_store %arg6[%c0_15, %c0_16, %c0_17], %45 {strides = array<i32>} : memref<1x19x1xf32, #tpu.memory_space<vmem>>, vector<1x19x1xf32>,
    %c0_18 = arith.constant 0 : index
    %c0_19 = arith.constant 0 : index
    %c0_20 = arith.constant 0 : index
    %47 = vector.load %arg7[%c0_18, %c0_19, %c0_20] : memref<1x19x1xf32, #tpu.memory_space<vmem>>, vector<1x19x1xf32>
    %48 = vector.broadcast %39 : vector<1x1x256xf32> to vector<1x19x256xf32>
    %49 = arith.mulf %41, %48 : vector<1x19x256xf32>
    %cst_21 = arith.constant dense<0.000000e+00> : vector<1x19xf32>
    %50 = vector.multi_reduction <add>, %49, %cst_21 [2] : vector<1x19x256xf32> to vector<1x19xf32>
    %51 = vector.shape_cast %50 : vector<1x19xf32> to vector<1x19x1xf32>
    %52 = arith.addf %47, %51 : vector<1x19x1xf32>
    %c0_22 = arith.constant 0 : index
    %c0_23 = arith.constant 0 : index
    %c0_24 = arith.constant 0 : index
    %53 = vector.load %arg7[%c0_22, %c0_23, %c0_24] : memref<1x19x1xf32, #tpu.memory_space<vmem>>, vector<1x19x1xf32>
    tpu.vector_store %arg7[%c0_22, %c0_23, %c0_24], %52 {strides = array<i32>} : memref<1x19x1xf32, #tpu.memory_space<vmem>>, vector<1x19x1xf32>,
    %c0_i32_25 = arith.constant 0 : i32
    %54 = arith.cmpi eq, %arg1, %c0_i32_25 : i32
    %55 = arith.extui %54 : i1 to i32
    %c0_i32_26 = arith.constant 0 : i32
    %56 = arith.cmpi ne, %55, %c0_i32_26 : i32
    scf.if %56 {
      %c0_27 = arith.constant 0 : index
      %c0_28 = arith.constant 0 : index
      %c0_29 = arith.constant 0 : index
      %57 = vector.load %arg6[%c0_27, %c0_28, %c0_29] : memref<1x19x1xf32, #tpu.memory_space<vmem>>, vector<1x19x1xf32>
      %c0_30 = arith.constant 0 : index
      %c0_31 = arith.constant 0 : index
      %c0_32 = arith.constant 0 : index
      %58 = vector.load %arg4[%c0_30, %c0_31, %c0_32] : memref<1x19x1xf32, #tpu.memory_space<vmem>>, vector<1x19x1xf32>
      tpu.vector_store %arg4[%c0_30, %c0_31, %c0_32], %57 {strides = array<i32>} : memref<1x19x1xf32, #tpu.memory_space<vmem>>, vector<1x19x1xf32>,
      %c0_33 = arith.constant 0 : index
      %c0_34 = arith.constant 0 : index
      %c0_35 = arith.constant 0 : index
      %59 = vector.load %arg7[%c0_33, %c0_34, %c0_35] : memref<1x19x1xf32, #tpu.memory_space<vmem>>, vector<1x19x1xf32>
      %c0_36 = arith.constant 0 : index
      %c0_37 = arith.constant 0 : index
      %c0_38 = arith.constant 0 : index
      %60 = vector.load %arg5[%c0_36, %c0_37, %c0_38] : memref<1x19x1xf32, #tpu.memory_space<vmem>>, vector<1x19x1xf32>
      tpu.vector_store %arg5[%c0_36, %c0_37, %c0_38], %59 {strides = array<i32>} : memref<1x19x1xf32, #tpu.memory_space<vmem>>, vector<1x19x1xf32>,
    } else {
    }
    return
  }
  func.func @transform_0(%arg0: i32, %arg1: i32) -> (i32, i32, i32) {
    %c0_i32 = arith.constant 0 : i32
    %c0_i32_0 = arith.constant 0 : i32
    return %arg0, %c0_i32, %arg1 : i32, i32, i32
  }
  func.func @transform_1(%arg0: i32, %arg1: i32) -> (i32, i32, i32) {
    %c0_i32 = arith.constant 0 : i32
    %c0_i32_0 = arith.constant 0 : i32
    return %arg0, %c0_i32, %arg1 : i32, i32, i32
  }
  func.func @transform_2(%arg0: i32, %arg1: i32) -> (i32, i32, i32) {
    %c0_i32 = arith.constant 0 : i32
    %c0_i32_0 = arith.constant 0 : i32
    %c0_i32_1 = arith.constant 0 : i32
    return %arg0, %c0_i32, %c0_i32_0 : i32, i32, i32
  }
  func.func @transform_3(%arg0: i32, %arg1: i32) -> (i32, i32, i32) {
    %c0_i32 = arith.constant 0 : i32
    %c0_i32_0 = arith.constant 0 : i32
    %c0_i32_1 = arith.constant 0 : i32
    return %arg0, %c0_i32, %c0_i32_0 : i32, i32, i32
  }
}

</mosaic_0001>

<llo_original>
// kernel: cross_entropy_2d.1
$region0: #{cross_entropy_2d.1}
  #allocation0 [shape = 'u32[]', space=smem, size = 0x4, offset = 0x4, fixed_abs, tag = 'smem constant byte address 0x4 - core index']
  #allocation1 [shape = 'u32[72,128]{1,0:T(1,128)}', space=vmem, size = 0x9000, scoped, tag = 'internal scratch']
  #allocation2 [shape = 'f32[1,19,1]{2,1,0:T(8,128)}', space=vmem, size = 0x3000, scoped, tag = 'scratch operand']
  #allocation3 [shape = 'f32[1,19,1]{2,1,0:T(8,128)}', space=vmem, size = 0x3000, scoped, tag = 'scratch operand']
  %s0 = inlined_call_operand.vmem [shape: f32[2,19,256], index: 0, kind: input, shape index: {}]
  %s1 = inlined_call_operand.vmem [shape: s32[2,1,256], index: 1, kind: input, shape index: {}]
  %s2 = inlined_call_operand.vmem [shape: f32[2,19,1], index: 2, kind: output, shape index: {0}]
  %s3 = inlined_call_operand.vmem [shape: f32[2,19,1], index: 3, kind: output, shape index: {1}]
  %4 = xla_tuple %s2, %s3
  %s5 = sld [smem:[#allocation0]]
  $region57: #{cross_entropy_2d.1} parent=0
    _
  %s7 = ssub.s32 1, %s5
  %s8 = scalar_select 0, %s7, %s5
  loop: start=0, step=1, limit=4
  $region2: #{cross_entropy_2d.1} parent=0 // loop_pre_header
    _
  $region3: #{cross_entropy_2d.1} parent=0 // loop_header
    %s10 = sphi 0, %s14
    %p11 = scmp.ge.s32.totalorder %s10, 4
    %s17 = sphi 0, %s29
    %s18 = sphi 0, %s25
    %s19 = sphi 0, %s17
    %s20 = sphi 0, %s18
    %s21 = sphi 0, %s19
    %s22 = sphi 0, %s20
    %s34 = sphi 0, %s36
    %s37 = sphi 0, %s34
    %s38 = sphi 0, %s37
    %s54 = sphi 0, %s38
    %s62 = sphi 0, %s64
    %s65 = sphi 0, %s62
    %s66 = sphi 0, %s65
    %s82 = sphi 0, %s66
    %s88 = sphi 0, %s90
    %s91 = sphi 0, %s88
    %s92 = sphi 0, %s91
    %s108 = sphi 0, %s92
    %s114 = sphi 0, %s116
    %s117 = sphi 0, %s114
    %s118 = sphi 0, %s117
    %s134 = sphi 0, %s118
  $region4: #{cross_entropy_2d.1} parent=0 // loop_header_branch
    %13 = sbr.rel (%p11) target = $region8
  $region5: #{cross_entropy_2d.1} parent=0 // loop_body
    %s15 = ssub.s32 %s10, 1
    %s16 = ssub.s32 %s10, 2
    %s23 = sadd.s32 1, %s18
    %p24 = scmp.ge.s32.totalorder %s23, 1
    %s25 = scalar_select %p24, 0, %s23
    %s26 = sadd.s32 1, %s17
    %s27 = scalar_select %p24, %s26, %s17
    %p28 = scmp.ge.s32.totalorder %s27, 2
    %s29 = scalar_select %p28, 0, %s27
    %s30 = ssub.s32 %s17, %s29
    %s31 = ssub.s32 %s18, %s25
    %s32 = sor.u32 %s30, %s31
    %p33 = scmp.eq.s32.totalorder %s32, 0
    %s35 = sadd.s32 %s34, 1
    %s36 = scalar_select %p33, %s34, %s35
    %p39 = pneg %p33
    %p40 = scmp.eq.s32.totalorder %s10, 1
    %p41 = por %p39, %p40
    %p42 = scmp.ne.s32.totalorder %s34, %s37
    %p43 = scmp.eq.s32.totalorder %s10, 0
    %p44 = por %p42, %p43
    %p45 = scmp.ne.s32.totalorder %s34, %s37
    %p46 = scmp.eq.s32.totalorder %s15, 1
    %p47 = por %p45, %p46
    %p48 = scmp.ne.s32.totalorder %s37, %s38
    %p49 = scmp.eq.s32.totalorder %s15, 0
    %p50 = por %p48, %p49
    %p51 = scmp.ne.s32.totalorder %s37, %s38
    %p52 = scmp.eq.s32.totalorder %s16, 1
    %p53 = por %p51, %p52
    %p55 = scmp.ne.s32.totalorder %s38, %s54
    %p56 = scmp.eq.s32.totalorder %s16, 0
    %p57 = por %p55, %p56
    %s58 = ssub.s32 %s17, %s29
    %s59 = ssub.s32 %s18, %s25
    %s60 = sor.u32 %s58, %s59
    %p61 = scmp.eq.s32.totalorder %s60, 0
    %s63 = sadd.s32 %s62, 1
    %s64 = scalar_select %p61, %s62, %s63
    %p67 = pneg %p61
    %p68 = scmp.eq.s32.totalorder %s10, 1
    %p69 = por %p67, %p68
    %p70 = scmp.ne.s32.totalorder %s62, %s65
    %p71 = scmp.eq.s32.totalorder %s10, 0
    %p72 = por %p70, %p71
    %p73 = scmp.ne.s32.totalorder %s62, %s65
    %p74 = scmp.eq.s32.totalorder %s15, 1
    %p75 = por %p73, %p74
    %p76 = scmp.ne.s32.totalorder %s65, %s66
    %p77 = scmp.eq.s32.totalorder %s15, 0
    %p78 = por %p76, %p77
    %p79 = scmp.ne.s32.totalorder %s65, %s66
    %p80 = scmp.eq.s32.totalorder %s16, 1
    %p81 = por %p79, %p80
    %p83 = scmp.ne.s32.totalorder %s66, %s82
    %p84 = scmp.eq.s32.totalorder %s16, 0
    %p85 = por %p83, %p84
    %s86 = ssub.s32 %s17, %s29
    %p87 = scmp.eq.s32.totalorder %s86, 0
    %s89 = sadd.s32 %s88, 1
    %s90 = scalar_select %p87, %s88, %s89
    %p93 = pneg %p87
    %p94 = scmp.eq.s32.totalorder %s10, 1
    %p95 = por %p93, %p94
    %p96 = scmp.ne.s32.totalorder %s88, %s91
    %p97 = scmp.eq.s32.totalorder %s10, 0
    %p98 = por %p96, %p97
    %p99 = scmp.ne.s32.totalorder %s88, %s91
    %p100 = scmp.eq.s32.totalorder %s15, 1
    %p101 = por %p99, %p100
    %p102 = scmp.ne.s32.totalorder %s91, %s92
    %p103 = scmp.eq.s32.totalorder %s15, 0
    %p104 = por %p102, %p103
    %p105 = scmp.ne.s32.totalorder %s91, %s92
    %p106 = scmp.eq.s32.totalorder %s16, 1
    %p107 = por %p105, %p106
    %p109 = scmp.ne.s32.totalorder %s92, %s108
    %p110 = scmp.eq.s32.totalorder %s16, 0
    %p111 = por %p109, %p110
    %s112 = ssub.s32 %s17, %s29
    %p113 = scmp.eq.s32.totalorder %s112, 0
    %s115 = sadd.s32 %s114, 1
    %s116 = scalar_select %p113, %s114, %s115
    %p119 = pneg %p113
    %p120 = scmp.eq.s32.totalorder %s10, 1
    %p121 = por %p119, %p120
    %p122 = scmp.ne.s32.totalorder %s114, %s117
    %p123 = scmp.eq.s32.totalorder %s10, 0
    %p124 = por %p122, %p123
    %p125 = scmp.ne.s32.totalorder %s114, %s117
    %p126 = scmp.eq.s32.totalorder %s15, 1
    %p127 = por %p125, %p126
    %p128 = scmp.ne.s32.totalorder %s117, %s118
    %p129 = scmp.eq.s32.totalorder %s15, 0
    %p130 = por %p128, %p129
    %p131 = scmp.ne.s32.totalorder %s117, %s118
    %p132 = scmp.eq.s32.totalorder %s16, 1
    %p133 = por %p131, %p132
    %p135 = scmp.ne.s32.totalorder %s118, %s134
    %p136 = scmp.eq.s32.totalorder %s16, 0
    %p137 = por %p135, %p136
    %p138 = scmp.le.s32.totalorder 1, %s10
    %p139 = scmp.lt.s32.totalorder %s10, 3
    %p140 = pnand %p138, %p139
    %p141 = pneg %p140
    // Predicated region
    $region9: #{cross_entropy_2d.1} parent=5 // pred_check
      _
    $region10: #{cross_entropy_2d.1} parent=5 // pred_check_branch
      %143 = sbr.rel (%p140) target = $region12
    $region11: #{cross_entropy_2d.1} parent=5 // pred_region
      %s144 = ssub.s32 %s10, 1
    $region12: #{cross_entropy_2d.1} parent=5 // pred_fallthru
      _
    %p145 = scmp.lt.s32.totalorder %s10, 2
    // Predicated region
    $region13: #{cross_entropy_2d.1} parent=5 // pred_check
      %p146 = pneg %p145
    $region14: #{cross_entropy_2d.1} parent=5 // pred_check_branch
      %148 = sbr.rel (%p146) target = $region16
    $region15: #{cross_entropy_2d.1} parent=5 // pred_region
      // Predicated region
      $region17: #{cross_entropy_2d.1} parent=15 // pred_check
        %p149 = pneg %p44
      $region18: #{cross_entropy_2d.1} parent=15 // pred_check_branch
        %151 = sbr.rel (%p149) target = $region20
      $region19: #{cross_entropy_2d.1} parent=15 // pred_region
        %s152 = smul.u32 2, %s18
        %p153 = scmp.lt.s32.totalorder %s17, 1
        %s154 = scalar_select %p153, %s17, 1
        %p155 = scmp.lt.s32.totalorder %s152, 1
        %s156 = scalar_select %p155, %s152, 1
        %s157 = smul.addr %s154, 6
        %s158 = sadd.s32 %s156, %s157
        %s159 = smul.addr %s158, 8
        %s160 = scalar_lea.vmem %s0, %s159
        %s161 = smul.u32 2, %s18
      $region20: #{cross_entropy_2d.1} parent=15 // pred_fallthru
        _
      // Predicated region
      $region21: #{cross_entropy_2d.1} parent=15 // pred_check
        %p162 = pneg %p72
      $region22: #{cross_entropy_2d.1} parent=15 // pred_check_branch
        %164 = sbr.rel (%p162) target = $region24
      $region23: #{cross_entropy_2d.1} parent=15 // pred_region
        %s165 = smul.u32 2, %s18
        %p166 = scmp.lt.s32.totalorder %s17, 1
        %s167 = scalar_select %p166, %s17, 1
        %p168 = scmp.lt.s32.totalorder %s165, 1
        %s169 = scalar_select %p168, %s165, 1
        %s170 = smul.addr %s167, 2
        %s171 = sadd.s32 %s169, %s170
        %s172 = scalar_lea.vmem %s1, %s171
        %s173 = smul.u32 2, %s18
      $region24: #{cross_entropy_2d.1} parent=15 // pred_fallthru
        _
    $region16: #{cross_entropy_2d.1} parent=5 // pred_fallthru
      _
    %p174 = scmp.le.s32.totalorder 1, %s10
    %p175 = scmp.lt.s32.totalorder %s10, 3
    %p176 = pnand %p174, %p175
    %p177 = pneg %p176
    // Predicated region
    $region25: #{cross_entropy_2d.1} parent=5 // pred_check
      _
    $region26: #{cross_entropy_2d.1} parent=5 // pred_check_branch
      %179 = sbr.rel (%p176) target = $region28
    $region27: #{cross_entropy_2d.1} parent=5 // pred_region
      %s180 = ssub.s32 %s10, 1
      %s181 = smul.u32 2, %s20
      %p182 = scmp.lt.s32.totalorder %s19, 1
      %s183 = scalar_select %p182, %s19, 1
      %p184 = scmp.lt.s32.totalorder %s181, 1
      %s185 = scalar_select %p184, %s181, 1
      %s186 = smul.addr %s183, 6
      %s187 = sadd.s32 %s185, %s186
      %s188 = smul.addr %s187, 8
      %s189 = scalar_lea.vmem %s0, %s188
      %p190 = pneg %p50
      %p191 = pneg %p47
      %s192 = smul.u32 2, %s20
      %p193 = scmp.lt.s32.totalorder %s19, 1
      %s194 = scalar_select %p193, %s19, 1
      %p195 = scmp.lt.s32.totalorder %s192, 1
      %s196 = scalar_select %p195, %s192, 1
      %s197 = smul.addr %s194, 2
      %s198 = sadd.s32 %s196, %s197
      %s199 = scalar_lea.vmem %s1, %s198
      %p200 = pneg %p78
      %p201 = pneg %p75
      %p202 = pneg %p104
      %p203 = pneg %p101
      %p204 = scmp.lt.s32.totalorder %s19, 1
      %s205 = scalar_select %p204, %s19, 1
      %s206 = smul.addr %s205, 3
      %s207 = smul.addr %s206, 8
      %s208 = scalar_lea.vmem %s2, %s207
      %p209 = pneg %p130
      %p210 = pneg %p127
      %p211 = scmp.lt.s32.totalorder %s19, 1
      %s212 = scalar_select %p211, %s19, 1
      %s213 = smul.addr %s212, 3
      %s214 = smul.addr %s213, 8
      %s215 = scalar_lea.vmem %s3, %s214
      %s216 = smul.u32 2, %s20
      %p217 = scmp.lt.s32.totalorder %s19, 1
      %s218 = scalar_select %p217, %s19, 1
      %p219 = scmp.lt.s32.totalorder %s216, 1
      %s220 = scalar_select %p219, %s216, 1
      %s221 = smul.addr %s218, 6
      %s222 = sadd.s32 %s220, %s221
      %s223 = smul.addr %s222, 8
      %s224 = scalar_lea.vmem %s0, %s223
      %s225 = smul.u32 2, %s20
      %s226 = smul.u32 2, %s20
      %p227 = scmp.lt.s32.totalorder %s19, 1
      %s228 = scalar_select %p227, %s19, 1
      %p229 = scmp.lt.s32.totalorder %s226, 1
      %s230 = scalar_select %p229, %s226, 1
      %s231 = smul.addr %s228, 2
      %s232 = sadd.s32 %s230, %s231
      %s233 = scalar_lea.vmem %s1, %s232
      %s234 = smul.u32 2, %s20
      %p235 = scmp.lt.s32.totalorder %s19, 1
      %s236 = scalar_select %p235, %s19, 1
      %s237 = smul.addr %s236, 3
      %s238 = smul.addr %s237, 8
      %s239 = scalar_lea.vmem %s2, %s238
      %p240 = scmp.lt.s32.totalorder %s19, 1
      %s241 = scalar_select %p240, %s19, 1
      %s242 = smul.addr %s241, 3
      %s243 = smul.addr %s242, 8
      %s244 = scalar_lea.vmem %s3, %s243
      %p245 = scmp.eq.s32.totalorder %s20, 0
      // Predicated region
      $region29: #{cross_entropy_2d.1} parent=27 // pred_check
        %p246 = pneg %p245
      $region30: #{cross_entropy_2d.1} parent=27 // pred_check_branch
        %248 = sbr.rel (%p246) target = $region32
      $region31: #{cross_entropy_2d.1} parent=27 // pred_region
        %vm249 = vcmask 7168
        %250 = vst.msk [vmem:[#allocation2] sm:$0xff] %vm249, 0.0
        %251 = vst.msk [vmem:[#allocation2 + $0x8] sm:$0xff] %vm249, 0.0
        %vm252 = vcmask 2048
        %253 = vst.msk [vmem:[#allocation2 + $0x10] sm:$0x7] %vm252, 0.0
        %254 = vst.msk [vmem:[#allocation3] sm:$0xff] %vm249, 0.0
        %255 = vst.msk [vmem:[#allocation3 + $0x8] sm:$0xff] %vm249, 0.0
        %256 = vst.msk [vmem:[#allocation3 + $0x10] sm:$0x7] %vm252, 0.0
      $region32: #{cross_entropy_2d.1} parent=27 // pred_fallthru
        _
      %v257 = vld [vmem:[%s224] sm:$0xff]
      %v258 = vld [vmem:[%s224 + $0x8] sm:$0xff]
      %v259 = vld [vmem:[%s224 + $0x10] sm:$0xff]
      %v260 = vld [vmem:[%s224 + $0x18] sm:$0xff]
      %v261 = vld [vmem:[%s224 + $0x20] sm:$0x7]
      %v262 = vld [vmem:[%s224 + $0x28] sm:$0x7]
      %v263 = vld [vmem:[%s233] sm:$0x3]
      %v264 = vlaneseq
      %v265 = vand.u32 %v264, 127
      %v266 = vadd.s32 %v265, 128
      %s267 = smul.u32 %s20, 256
      %v268 = vstv %s267
      %v269 = vadd.s32 %v265, %v268
      %v270 = vadd.s32 %v266, %v268
      %vm271 = vcmp.lt.s32.totalorder %v269, 256
      %vm272 = vcmp.lt.s32.totalorder %v270, 256
      %vm273 = vcmp.ge.s32.totalorder %v263, 0
      %vm274 = vcmp.ne.s32.totalorder %v263, 255
      %vm275 = vmand %vm273, %vm274
      %v276 = vsel %vm271, 1, 0
      %v277 = vsel %vm272, 1, 0
      %v278 = vrot.slane %v277, 7
      %vm279 = vcmask 1040384
      %v280 = vsel %vm279, %v276, %v278
      %vm281 = vcmp.ne.s32.totalorder %v280, 0
      %vm282 = vmand %vm275, %vm281
      %v283 = vsel %vm282, 1, 0
      %v284 = vcvt.s32.f32 %v283
      %v285 = vlaneseq
      %v286 = vshrl.u32 %v285, 7
      %v287 = vadd.s32 %v286, 8
      %v288 = vadd.s32 %v286, 16
      %v289 = vperm.slane %v263, 0
      %v290 = vperm.slane %v263, 1
      %vm291 = vcmp.eq.s32.totalorder %v289, %v286
      %vm292 = vcmp.eq.s32.totalorder %v290, %v286
      %vm293 = vcmp.eq.s32.totalorder %v289, %v287
      %vm294 = vcmp.eq.s32.totalorder %v290, %v287
      %vm295 = vcmp.eq.s32.totalorder %v289, %v288
      %vm296 = vcmp.eq.s32.totalorder %v290, %v288
      %v297 = vsel %vm291, 1, 0
      %v298 = vsel %vm292, 1, 0
      %v299 = vsel %vm293, 1, 0
      %v300 = vsel %vm294, 1, 0
      %v301 = vsel %vm295, 1, 0
      %v302 = vsel %vm296, 1, 0
      %v303 = vcvt.s32.f32 %v297
      %v304 = vcvt.s32.f32 %v298
      %v305 = vcvt.s32.f32 %v299
      %v306 = vcvt.s32.f32 %v300
      %v307 = vcvt.s32.f32 %v301
      %v308 = vcvt.s32.f32 %v302
      %vm309 = vcmask 1042432
      %v310 = vsel %vm309, %v261, -inf
      %v311 = vmax.f32 %v257, %v310
      %v312 = vmax.f32 %v311, %v259
      %v313 = vrot.slane %v312, 4
      %v314 = vmax.f32 %v312, %v313
      %v315 = vrot.slane %v314, 2
      %v316 = vmax.f32 %v314, %v315
      %v317 = vrot.slane %v316, 1
      %v318 = vmax.f32 %v316, %v317
      %v319 = vsel %vm309, %v262, -inf
      %v320 = vmax.f32 %v258, %v319
      %v321 = vmax.f32 %v320, %v260
      %v322 = vrot.slane %v321, 4
      %v323 = vmax.f32 %v321, %v322
      %v324 = vrot.slane %v323, 2
      %v325 = vmax.f32 %v323, %v324
      %v326 = vrot.slane %v325, 1
      %v327 = vmax.f32 %v325, %v326
      %v328 = vsub.f32 %v257, %v318
      %v329 = vsub.f32 %v258, %v327
      %v330 = vsub.f32 %v259, %v318
      %v331 = vsub.f32 %v260, %v327
      %v332 = vsub.f32 %v261, %v318
      %v333 = vsub.f32 %v262, %v327
      %v334 = vmul.f32 %v328, 1.442695
      %v335 = vpow.pop %v334
      %v336 = vmul.f32 %v329, 1.442695
      %v337 = vpow.pop %v336
      %v338 = vmul.f32 %v330, 1.442695
      %v339 = vpow.pop %v338
      %v340 = vmul.f32 %v331, 1.442695
      %v341 = vpow.pop %v340
      %v342 = vmul.f32 %v332, 1.442695
      %v343 = vpow.pop %v342
      %v344 = vmul.f32 %v333, 1.442695
      %v345 = vpow.pop %v344
      %v346 = vadd.f32 %v335, %v339
      %v347 = vsel %vm309, %v343, 0.0
      %v348 = vadd.f32 %v346, %v347
      %v349 = vrot.slane %v348, 4
      %v350 = vadd.f32 %v348, %v349
      %v351 = vrot.slane %v350, 2
      %v352 = vadd.f32 %v350, %v351
      %v353 = vrot.slane %v352, 1
      %v354 = vadd.f32 %v352, %v353
      %v355 = vadd.f32 %v337, %v341
      %v356 = vsel %vm309, %v345, 0.0
      %v357 = vadd.f32 %v355, %v356
      %v358 = vrot.slane %v357, 4
      %v359 = vadd.f32 %v357, %v358
      %v360 = vrot.slane %v359, 2
      %v361 = vadd.f32 %v359, %v360
      %v362 = vrot.slane %v361, 1
      %v363 = vadd.f32 %v361, %v362
      %v364 = vlog2.pop %v354
      %v365 = vmul.f32 %v364, 0.6931472
      %v366 = vlog2.pop %v363
      %v367 = vmul.f32 %v366, 0.6931472
      %v368 = vadd.f32 %v318, %v365
      %v369 = vadd.f32 %v327, %v367
      %v370 = vmul.f32 %v303, %v257
      %v371 = vmul.f32 %v304, %v258
      %v372 = vmul.f32 %v305, %v259
      %v373 = vmul.f32 %v306, %v260
      %v374 = vmul.f32 %v307, %v261
      %v375 = vmul.f32 %v308, %v262
      %v376 = vadd.f32 %v370, %v372
      %v377 = vsel %vm309, %v374, 0.0
      %v378 = vadd.f32 %v376, %v377
      %v379 = vrot.slane %v378, 4
      %v380 = vadd.f32 %v378, %v379
      %v381 = vrot.slane %v380, 2
      %v382 = vadd.f32 %v380, %v381
      %v383 = vrot.slane %v382, 1
      %v384 = vadd.f32 %v382, %v383
      %v385 = vadd.f32 %v371, %v373
      %v386 = vsel %vm309, %v375, 0.0
      %v387 = vadd.f32 %v385, %v386
      %v388 = vrot.slane %v387, 4
      %v389 = vadd.f32 %v387, %v388
      %v390 = vrot.slane %v389, 2
      %v391 = vadd.f32 %v389, %v390
      %v392 = vrot.slane %v391, 1
      %v393 = vadd.f32 %v391, %v392
      %v394 = vsub.f32 %v368, %v384
      %v395 = vsub.f32 %v369, %v393
      %v398 = vrot.slane %v395, 7
      %v399 = vsel %vm279, %v394, %v398
      %v401 = vsel %vm282, %v399, 0.0
      %v403 = vperm.slane %v284, 0
      %v404 = vperm.slane %v284, 1
      %v407 = vmul.f32 %v303, %v403
      %v408 = vmul.f32 %v304, %v404
      %v409 = vmul.f32 %v305, %v403
      %v410 = vmul.f32 %v306, %v404
      %v411 = vmul.f32 %v307, %v403
      %v412 = vmul.f32 %v308, %v404
      %v413 = vld [vmem:[#allocation2] sm:$0xff]
      %v414 = vld [vmem:[#allocation2 + $0x8] sm:$0xff]
      %v415 = vld [vmem:[#allocation2 + $0x10] sm:$0x7]
      %v416 = vadd.f32 %v407, %v408
      %417 = vadd.xlane.f32.xlu0 %v416
      %v418 = vpop.xlane.xlu0 %417
      %v419 = vadd.f32 %v409, %v410
      %420 = vadd.xlane.f32.xlu0 %v419
      %v421 = vpop.xlane.xlu0 %420
      %v422 = vsel %vm309, %v411, 0.0
      %v423 = vsel %vm309, %v412, 0.0
      %v424 = vadd.f32 %v422, %v423
      %425 = vadd.xlane.f32.xlu0 %v424
      %v426 = vpop.xlane.xlu0 %425
      %v427 = vadd.f32 %v413, %v418
      %v428 = vadd.f32 %v414, %v421
      %v429 = vadd.f32 %v415, %v426
      %vm430 = vcmask 7168
      %431 = vst.msk [vmem:[#allocation2] sm:$0xff] %vm430, %v427
      %432 = vst.msk [vmem:[#allocation2 + $0x8] sm:$0xff] %vm430, %v428
      %vm433 = vcmask 2048
      %434 = vst.msk [vmem:[#allocation2 + $0x10] sm:$0x7] %vm433, %v429
      %v435 = vld [vmem:[#allocation3] sm:$0xff]
      %v436 = vld [vmem:[#allocation3 + $0x8] sm:$0xff]
      %v437 = vld [vmem:[#allocation3 + $0x10] sm:$0x7]
      %v439 = vperm.slane %v401, 0
      %v440 = vperm.slane %v401, 1
      %v443 = vmul.f32 %v407, %v439
      %v444 = vmul.f32 %v408, %v440
      %v445 = vmul.f32 %v409, %v439
      %v446 = vmul.f32 %v410, %v440
      %v447 = vmul.f32 %v411, %v439
      %v448 = vmul.f32 %v412, %v440
      %v449 = vadd.f32 %v443, %v444
      %450 = vadd.xlane.f32.xlu0 %v449
      %v451 = vpop.xlane.xlu0 %450
      %v452 = vadd.f32 %v445, %v446
      %453 = vadd.xlane.f32.xlu0 %v452
      %v454 = vpop.xlane.xlu0 %453
      %v455 = vsel %vm309, %v447, 0.0
      %v456 = vsel %vm309, %v448, 0.0
      %v457 = vadd.f32 %v455, %v456
      %458 = vadd.xlane.f32.xlu0 %v457
      %v459 = vpop.xlane.xlu0 %458
      %v460 = vadd.f32 %v435, %v451
      %v461 = vadd.f32 %v436, %v454
      %v462 = vadd.f32 %v437, %v459
      %463 = vst.msk [vmem:[#allocation3] sm:$0xff] %vm430, %v460
      %464 = vst.msk [vmem:[#allocation3 + $0x8] sm:$0xff] %vm430, %v461
      %465 = vst.msk [vmem:[#allocation3 + $0x10] sm:$0x7] %vm433, %v462
      // Predicated region
      $region33: #{cross_entropy_2d.1} parent=27 // pred_check
        %p466 = pneg %p245
      $region34: #{cross_entropy_2d.1} parent=27 // pred_check_branch
        %468 = sbr.rel (%p466) target = $region36
      $region35: #{cross_entropy_2d.1} parent=27 // pred_region
        %v469 = vld [vmem:[#allocation2] sm:$0xff]
        %v470 = vld [vmem:[#allocation2 + $0x8] sm:$0xff]
        %v471 = vld [vmem:[#allocation2 + $0x10] sm:$0x7]
        %472 = vst.msk [vmem:[%s239] sm:$0xff] %vm430, %v469
        %473 = vst.msk [vmem:[%s239 + $0x8] sm:$0xff] %vm430, %v470
        %474 = vst.msk [vmem:[%s239 + $0x10] sm:$0x7] %vm433, %v471
        %v475 = vld [vmem:[#allocation3] sm:$0xff]
        %v476 = vld [vmem:[#allocation3 + $0x8] sm:$0xff]
        %v477 = vld [vmem:[#allocation3 + $0x10] sm:$0x7]
        %478 = vst.msk [vmem:[%s244] sm:$0xff] %vm430, %v475
        %479 = vst.msk [vmem:[%s244 + $0x8] sm:$0xff] %vm430, %v476
        %480 = vst.msk [vmem:[%s244 + $0x10] sm:$0x7] %vm433, %v477
      $region36: #{cross_entropy_2d.1} parent=27 // pred_fallthru
        _
      %p481 = scmp.lt.s32.totalorder %s19, 1
      %s482 = scalar_select %p481, %s19, 1
      %s483 = smul.addr %s482, 3
      %s484 = smul.addr %s483, 8
      %s485 = scalar_lea.vmem %s2, %s484
      %p486 = scmp.lt.s32.totalorder %s19, 1
      %s487 = scalar_select %p486, %s19, 1
      %s488 = smul.addr %s487, 3
      %s489 = smul.addr %s488, 8
      %s490 = scalar_lea.vmem %s3, %s489
      // Predicated region
      $region37: #{cross_entropy_2d.1} parent=27 // pred_check
        %p491 = pneg %p101
      $region38: #{cross_entropy_2d.1} parent=27 // pred_check_branch
        %493 = sbr.rel (%p491) target = $region40
      $region39: #{cross_entropy_2d.1} parent=27 // pred_region
        _
      $region40: #{cross_entropy_2d.1} parent=27 // pred_fallthru
        _
      // Predicated region
      $region41: #{cross_entropy_2d.1} parent=27 // pred_check
        %p494 = pneg %p127
      $region42: #{cross_entropy_2d.1} parent=27 // pred_check_branch
        %496 = sbr.rel (%p494) target = $region44
      $region43: #{cross_entropy_2d.1} parent=27 // pred_region
        _
      $region44: #{cross_entropy_2d.1} parent=27 // pred_fallthru
        _
    $region28: #{cross_entropy_2d.1} parent=5 // pred_fallthru
      _
    %p497 = scmp.le.s32.totalorder 2, %s10
    // Predicated region
    $region45: #{cross_entropy_2d.1} parent=5 // pred_check
      %p498 = pneg %p497
    $region46: #{cross_entropy_2d.1} parent=5 // pred_check_branch
      %500 = sbr.rel (%p498) target = $region48
    $region47: #{cross_entropy_2d.1} parent=5 // pred_region
      %s501 = ssub.s32 %s10, 2
      // Predicated region
      $region49: #{cross_entropy_2d.1} parent=47 // pred_check
        %p502 = pneg %p107
      $region50: #{cross_entropy_2d.1} parent=47 // pred_check_branch
        %504 = sbr.rel (%p502) target = $region52
      $region51: #{cross_entropy_2d.1} parent=47 // pred_region
        %p505 = scmp.lt.s32.totalorder %s21, 1
        %s506 = scalar_select %p505, %s21, 1
        %s507 = smul.addr %s506, 3
        %s508 = smul.addr %s507, 8
        %s509 = scalar_lea.vmem %s2, %s508
      $region52: #{cross_entropy_2d.1} parent=47 // pred_fallthru
        _
      // Predicated region
      $region53: #{cross_entropy_2d.1} parent=47 // pred_check
        %p510 = pneg %p133
      $region54: #{cross_entropy_2d.1} parent=47 // pred_check_branch
        %512 = sbr.rel (%p510) target = $region56
      $region55: #{cross_entropy_2d.1} parent=47 // pred_region
        %p513 = scmp.lt.s32.totalorder %s21, 1
        %s514 = scalar_select %p513, %s21, 1
        %s515 = smul.addr %s514, 3
        %s516 = smul.addr %s515, 8
        %s517 = scalar_lea.vmem %s3, %s516
      $region56: #{cross_entropy_2d.1} parent=47 // pred_fallthru
        _
    $region48: #{cross_entropy_2d.1} parent=5 // pred_fallthru
      _
  $region6: #{cross_entropy_2d.1} parent=0 // loop_footer
    %s14 = sadd.s32 1, %s10
  $region7: #{cross_entropy_2d.1} parent=0 // loop_footer_branch
    %9 = sbr.rel target = $region3
  $region8: #{cross_entropy_2d.1} parent=0 // loop_exit
    _

</llo_original>
